<compile_context>
chip_gen: v7x
topology: tpu7x:2x2x1
jax: 0.10.0
libtpu: 0.0.40
codegen_flags: <defaults>
</compile_context>

<pallas_src>
import functools

import jax
import jax.numpy as jnp
from jax import lax
from jax.experimental import pallas as pl
from jax.experimental.pallas import tpu as pltpu

NEG_SLOPE = 0.2


def _leaky(x):
    return jnp.where(x > 0, x, NEG_SLOPE * x)


def resblock_kernel(mask_ref, x_ref, w1_ref, w2_ref, out_ref, *, W):
    # mask_ref : (9*C + 1, L) f32   border-validity mask, ones row last (bias)
    # x_ref    : (C, L)       f32   input; pixels (batch_tile * H*W) on lanes
    # w*_ref   : (C, 9*C + 1) bf16  im2col weights, BN scale folded in,
    #                               last column = folded BN shift (bias)
    # out_ref  : (C, L)       f32
    C, L = x_ref.shape

    x = x_ref[...]                    # (C, L) f32
    mask = mask_ref[...]              # (9*C+1, L) f32
    ones = jnp.ones((1, L), jnp.float32)

    def im2col(a):
        # Stack the 9 statically-shifted taps + a ones row (bias), then zero
        # invalid border / cross-image positions with ONE dense multiply.
        rows = []
        for dy in (-1, 0, 1):
            for dx in (-1, 0, 1):
                s = dy * W + dx
                rows.append(a if s == 0 else pltpu.roll(a, (-s) % L, axis=1))
        rows.append(ones)
        stack = jnp.concatenate(rows, axis=0)          # (9*C + 1, L) f32
        return (stack * mask).astype(jnp.bfloat16)     # bf16 MXU operand

    # conv1 + BN1 (scale/shift folded) -> LeakyReLU
    h1 = _leaky(jnp.dot(w1_ref[...], im2col(x),
                        preferred_element_type=jnp.float32))
    # conv2 + BN2 (scale/shift folded)
    h2 = jnp.dot(w2_ref[...], im2col(h1),
                 preferred_element_type=jnp.float32)
    # residual add (identity, inc == outc) + LeakyReLU
    out_ref[...] = _leaky(h2 + x)


def _prep_weight(w_oihw, scale, shift):
    """Fold BN scale/shift into an im2col weight matrix (Cout, 9*Cin + 1)."""
    Co, Ci, _, _ = w_oihw.shape
    w = (w_oihw * scale[:, None, None, None]).astype(jnp.float32)  # (Co,Ci,3,3)
    # Row order of the im2col stack: index = tap*Ci + ci, tap = (dy+1)*3+(dx+1).
    w = jnp.transpose(w, (2, 3, 1, 0)).reshape(9 * Ci, Co)         # (9*Ci, Co)
    w = jnp.concatenate([w, shift[None, :].astype(jnp.float32)], axis=0)
    return jnp.transpose(w).astype(jnp.bfloat16)                   # (Co, 9*Ci+1)


def residual_block_pallas(x_nchw, w1_oihw, s1, b1, w2_oihw, s2, b2,
                          *, images_per_step=None):
    """ResidualBlock forward (inference-mode BatchNorm).

    x_nchw : (B, C, H, W) float32 (PyTorch layout)
    w*_oihw: (Cout, Cin, 3, 3)    conv weights (PyTorch layout)
    s*, b* : (C,)                 folded BatchNorm scale / shift
    """
    B, Cin, H, W = x_nchw.shape
    Cmid = w1_oihw.shape[0]
    Cout = w2_oihw.shape[0]
    assert Cin == Cout, "identity residual path requires inc == outc"
    assert Cmid == Cin, "shared im2col mask layout assumes scale == 1.0"
    HW = H * W
    assert HW % 128 == 0, "flattened spatial dim must be a multiple of 128"

    if images_per_step is None:
        # Single grid step (full batch folded into lanes) is optimal on the
        # single-TensorCore v5e / v6e.
        # TODO(synk): on v7x use images_per_step = B // 2 so the parallel
        # batch-tile grid axis feeds both TensorCores.
        images_per_step = B
    assert B % images_per_step == 0
    steps = B // images_per_step
    L = images_per_step * HW
    K = 9 * Cin + 1

    # NCHW -> (C, B*HW): per-image pixel blocks contiguous along lanes.
    x_flat = jnp.transpose(x_nchw.reshape(B, Cin, HW), (1, 0, 2)).reshape(
        Cin, B * HW)

    w1k = _prep_weight(w1_oihw, s1, b1)   # (Cmid, 9*Cin + 1) bf16
    w2k = _prep_weight(w2_oihw, s2, b2)   # (Cout, 9*Cmid + 1) bf16

    # Precomputed border mask, pre-expanded over channels, plus a ones row for
    # the bias column: (9*Cin + 1, L).  Built once in the wrapper so the kernel
    # applies it with a single dense multiply (no per-step iota / div / mod).
    p = jnp.arange(L, dtype=jnp.int32) % HW
    py = p // W
    px = p % W
    mrows = []
    for dy in (-1, 0, 1):
        for dx in (-1, 0, 1):
            valid = ((py + dy >= 0) & (py + dy < H) &
                     (px + dx >= 0) & (px + dx < W)).astype(jnp.float32)
            mrows.append(jnp.tile(valid[None, :], (Cin, 1)))
    mrows.append(jnp.ones((1, L), jnp.float32))
    mask = jnp.concatenate(mrows, axis=0)             # (9*Cin + 1, L)

    kernel = functools.partial(resblock_kernel, W=W)

    out = pl.pallas_call(
        kernel,
        out_shape=jax.ShapeDtypeStruct((Cout, B * HW), jnp.float32),
        grid_spec=pltpu.PrefetchScalarGridSpec(
            num_scalar_prefetch=0,
            grid=(steps,),
            in_specs=[
                pl.BlockSpec((K, L), lambda b: (0, 0)),      # mask (constant)
                pl.BlockSpec((Cin, L), lambda b: (0, b)),    # x batch-tile
                pl.BlockSpec((Cmid, K), lambda b: (0, 0)),   # w1 (constant)
                pl.BlockSpec((Cout, K), lambda b: (0, 0)),   # w2 (constant)
            ],
            out_specs=pl.BlockSpec((Cout, L), lambda b: (0, b)),
        ),
        compiler_params=pltpu.CompilerParams(
            dimension_semantics=("parallel",)),
    )(mask, x_flat, w1k, w2k)

    # (C, B*HW) -> NCHW
    return jnp.transpose(out.reshape(Cout, B, HW), (1, 0, 2)).reshape(
        B, Cout, H, W)


def ref_forward(x, w1_oihw, s1, b1, w2_oihw, s2, b2):
    """Pure-JAX NCHW reference matching the PyTorch module (inference BN)."""
    dn = ("NCHW", "OIHW", "NCHW")
    h = lax.conv_general_dilated(x, w1_oihw, (1, 1), "SAME",
                                 dimension_numbers=dn)
    h = _leaky(h * s1[None, :, None, None] + b1[None, :, None, None])
    h = lax.conv_general_dilated(h, w2_oihw, (1, 1), "SAME",
                                 dimension_numbers=dn)
    h = h * s2[None, :, None, None] + b2[None, :, None, None]
    return _leaky(h + x)


def fold_bn(gamma, beta, mean, var, eps=1e-5):
    scale = gamma / jnp.sqrt(var + eps)
    shift = beta - mean * scale
    return scale, shift


if __name__ == "__main__":
    # Small shapes consistent with the module: inc = outc = midc = 4
    # (conv_expand is None, identity branch is x), batch = 2, spatial = 16x16.
    B, C, H, W = 2, 4, 16, 16
    Cin = Cmid = Cout = C

    key = jax.random.PRNGKey(0)
    keys = jax.random.split(key, 12)

    x = jax.random.normal(keys[0], (B, C, H, W), jnp.float32)

    # Conv weights in PyTorch (out, in, kh, kw) layout, no bias.
    w1 = 0.1 * jax.random.normal(keys[1], (Cmid, Cin, 3, 3), jnp.float32)
    w2 = 0.1 * jax.random.normal(keys[2], (Cout, Cmid, 3, 3), jnp.float32)

    # BatchNorm params + running stats (inference mode), folded to scale/shift.
    g1 = 1.0 + 0.1 * jax.random.normal(keys[3], (Cmid,), jnp.float32)
    be1 = 0.1 * jax.random.normal(keys[4], (Cmid,), jnp.float32)
    m1 = 0.1 * jax.random.normal(keys[5], (Cmid,), jnp.float32)
    v1 = 1.0 + 0.1 * jnp.abs(jax.random.normal(keys[6], (Cmid,), jnp.float32))
    g2 = 1.0 + 0.1 * jax.random.normal(keys[7], (Cout,), jnp.float32)
    be2 = 0.1 * jax.random.normal(keys[8], (Cout,), jnp.float32)
    m2 = 0.1 * jax.random.normal(keys[9], (Cout,), jnp.float32)
    v2 = 1.0 + 0.1 * jnp.abs(jax.random.normal(keys[10], (Cout,), jnp.float32))
    s1, b1 = fold_bn(g1, be1, m1, v1)
    s2, b2 = fold_bn(g2, be2, m2, v2)

    out = residual_block_pallas(x, w1, s1, b1, w2, s2, b2)
    out = jax.block_until_ready(out)
    assert out.shape == (B, Cout, H, W)

    ref = ref_forward(x, w1, s1, b1, w2, s2, b2)
    max_err = float(jnp.max(jnp.abs(out - ref)))
    # bf16 MXU operands (f32 accumulation / elementwise): tolerance relaxed
    # accordingly relative to the pure-f32 reference.
    assert jnp.allclose(out, ref, rtol=1e-2, atol=1e-2), max_err

    print("KERNEL_OK")
</pallas_src>

<mosaic_0001>
module attributes {stable_mosaic.version = 11 : i64} {
  func.func @resblock_kernel(%arg0: i32, %arg1: memref<37x512xf32, #tpu.memory_space<vmem>>, %arg2: memref<4x512xf32, #tpu.memory_space<vmem>>, %arg3: memref<4x37xbf16, #tpu.memory_space<vmem>>, %arg4: memref<4x37xbf16, #tpu.memory_space<vmem>>, %arg5: memref<4x512xf32, #tpu.memory_space<vmem>>) attributes {dimension_semantics = [#tpu.dimension_semantics<parallel>], iteration_bounds = array<i64: 1>, scalar_prefetch = 0 : i64, scratch_operands = 0 : i64, tpu.core_type = #tpu.core_type<tc>, window_params = [{pipeline_mode = #tpu.pipeline_mode<synchronous>, transform_indices = @transform_0, window_bounds = array<i64: 37, 512>}, {transform_indices = @transform_1, window_bounds = array<i64: 4, 512>}, {pipeline_mode = #tpu.pipeline_mode<synchronous>, transform_indices = @transform_2, window_bounds = array<i64: 4, 37>}, {pipeline_mode = #tpu.pipeline_mode<synchronous>, transform_indices = @transform_3, window_bounds = array<i64: 4, 37>}, {transform_indices = @transform_4, window_bounds = array<i64: 4, 512>}]} {
    %c0 = arith.constant 0 : index
    %c0_0 = arith.constant 0 : index
    %0 = vector.load %arg2[%c0, %c0_0] : memref<4x512xf32, #tpu.memory_space<vmem>>, vector<4x512xf32>
    %c0_1 = arith.constant 0 : index
    %c0_2 = arith.constant 0 : index
    %1 = vector.load %arg1[%c0_1, %c0_2] : memref<37x512xf32, #tpu.memory_space<vmem>>, vector<37x512xf32>
    %cst = arith.constant 1.000000e+00 : f32
    %2 = vector.broadcast %cst : f32 to vector<1x512xf32>
    %c0_3 = arith.constant 0 : index
    %c0_4 = arith.constant 0 : index
    %3 = vector.load %arg3[%c0_3, %c0_4] : memref<4x37xbf16, #tpu.memory_space<vmem>>, vector<4x37xbf16>
    %c17_i32 = arith.constant 17 : i32
    %4 = tpu.dynamic_rotate %0 by %c17_i32 dim 1 : vector<4x512xf32>, i32 -> vector<4x512xf32>
    %c16_i32 = arith.constant 16 : i32
    %5 = tpu.dynamic_rotate %0 by %c16_i32 dim 1 : vector<4x512xf32>, i32 -> vector<4x512xf32>
    %c15_i32 = arith.constant 15 : i32
    %6 = tpu.dynamic_rotate %0 by %c15_i32 dim 1 : vector<4x512xf32>, i32 -> vector<4x512xf32>
    %c1_i32 = arith.constant 1 : i32
    %7 = tpu.dynamic_rotate %0 by %c1_i32 dim 1 : vector<4x512xf32>, i32 -> vector<4x512xf32>
    %c511_i32 = arith.constant 511 : i32
    %8 = tpu.dynamic_rotate %0 by %c511_i32 dim 1 : vector<4x512xf32>, i32 -> vector<4x512xf32>
    %c497_i32 = arith.constant 497 : i32
    %9 = tpu.dynamic_rotate %0 by %c497_i32 dim 1 : vector<4x512xf32>, i32 -> vector<4x512xf32>
    %c496_i32 = arith.constant 496 : i32
    %10 = tpu.dynamic_rotate %0 by %c496_i32 dim 1 : vector<4x512xf32>, i32 -> vector<4x512xf32>
    %c495_i32 = arith.constant 495 : i32
    %11 = tpu.dynamic_rotate %0 by %c495_i32 dim 1 : vector<4x512xf32>, i32 -> vector<4x512xf32>
    %12 = tpu.concatenate %4, %5, %6, %7, %0, %8, %9, %10, %11, %2 in 0 : vector<4x512xf32>, vector<4x512xf32>, vector<4x512xf32>, vector<4x512xf32>, vector<4x512xf32>, vector<4x512xf32>, vector<4x512xf32>, vector<4x512xf32>, vector<4x512xf32>, vector<1x512xf32> -> vector<37x512xf32>
    %13 = arith.mulf %12, %1 : vector<37x512xf32>
    %14 = arith.truncf %13 : vector<37x512xf32> to vector<37x512xbf16>
    %cst_5 = arith.constant dense<0.000000e+00> : vector<4x512xf32>
    %15 = tpu.matmul %3, %14, %cst_5 {dimension_numbers = #tpu.dot_dimension_numbers<[1], [0], [0], [1], [0, 0, 1, 1], [], []>} : vector<4x37xbf16>, vector<37x512xbf16>, vector<4x512xf32> -> vector<4x512xf32>
    %cst_6 = arith.constant 0.000000e+00 : f32
    %16 = vector.broadcast %cst_6 : f32 to vector<4x512xf32>
    %17 = arith.cmpf ogt, %15, %16 : vector<4x512xf32>
    %cst_7 = arith.constant 2.000000e-01 : f32
    %18 = vector.broadcast %cst_7 : f32 to vector<4x512xf32>
    %19 = arith.mulf %18, %15 : vector<4x512xf32>
    %20 = arith.select %17, %15, %19 : vector<4x512xi1>, vector<4x512xf32>
    %c0_8 = arith.constant 0 : index
    %c0_9 = arith.constant 0 : index
    %21 = vector.load %arg4[%c0_8, %c0_9] : memref<4x37xbf16, #tpu.memory_space<vmem>>, vector<4x37xbf16>
    %c17_i32_10 = arith.constant 17 : i32
    %22 = tpu.dynamic_rotate %20 by %c17_i32_10 dim 1 : vector<4x512xf32>, i32 -> vector<4x512xf32>
    %c16_i32_11 = arith.constant 16 : i32
    %23 = tpu.dynamic_rotate %20 by %c16_i32_11 dim 1 : vector<4x512xf32>, i32 -> vector<4x512xf32>
    %c15_i32_12 = arith.constant 15 : i32
    %24 = tpu.dynamic_rotate %20 by %c15_i32_12 dim 1 : vector<4x512xf32>, i32 -> vector<4x512xf32>
    %c1_i32_13 = arith.constant 1 : i32
    %25 = tpu.dynamic_rotate %20 by %c1_i32_13 dim 1 : vector<4x512xf32>, i32 -> vector<4x512xf32>
    %c511_i32_14 = arith.constant 511 : i32
    %26 = tpu.dynamic_rotate %20 by %c511_i32_14 dim 1 : vector<4x512xf32>, i32 -> vector<4x512xf32>
    %c497_i32_15 = arith.constant 497 : i32
    %27 = tpu.dynamic_rotate %20 by %c497_i32_15 dim 1 : vector<4x512xf32>, i32 -> vector<4x512xf32>
    %c496_i32_16 = arith.constant 496 : i32
    %28 = tpu.dynamic_rotate %20 by %c496_i32_16 dim 1 : vector<4x512xf32>, i32 -> vector<4x512xf32>
    %c495_i32_17 = arith.constant 495 : i32
    %29 = tpu.dynamic_rotate %20 by %c495_i32_17 dim 1 : vector<4x512xf32>, i32 -> vector<4x512xf32>
    %30 = tpu.concatenate %22, %23, %24, %25, %20, %26, %27, %28, %29, %2 in 0 : vector<4x512xf32>, vector<4x512xf32>, vector<4x512xf32>, vector<4x512xf32>, vector<4x512xf32>, vector<4x512xf32>, vector<4x512xf32>, vector<4x512xf32>, vector<4x512xf32>, vector<1x512xf32> -> vector<37x512xf32>
    %31 = arith.mulf %30, %1 : vector<37x512xf32>
    %32 = arith.truncf %31 : vector<37x512xf32> to vector<37x512xbf16>
    %cst_18 = arith.constant dense<0.000000e+00> : vector<4x512xf32>
    %33 = tpu.matmul %21, %32, %cst_18 {dimension_numbers = #tpu.dot_dimension_numbers<[1], [0], [0], [1], [0, 0, 1, 1], [], []>} : vector<4x37xbf16>, vector<37x512xbf16>, vector<4x512xf32> -> vector<4x512xf32>
    %34 = arith.addf %33, %0 : vector<4x512xf32>
    %cst_19 = arith.constant 0.000000e+00 : f32
    %35 = vector.broadcast %cst_19 : f32 to vector<4x512xf32>
    %36 = arith.cmpf ogt, %34, %35 : vector<4x512xf32>
    %cst_20 = arith.constant 2.000000e-01 : f32
    %37 = vector.broadcast %cst_20 : f32 to vector<4x512xf32>
    %38 = arith.mulf %37, %34 : vector<4x512xf32>
    %39 = arith.select %36, %34, %38 : vector<4x512xi1>, vector<4x512xf32>
    %c0_21 = arith.constant 0 : index
    %c0_22 = arith.constant 0 : index
    %40 = vector.load %arg5[%c0_21, %c0_22] : memref<4x512xf32, #tpu.memory_space<vmem>>, vector<4x512xf32>
    tpu.vector_store %arg5[%c0_21, %c0_22], %39 {strides = array<i32>} : memref<4x512xf32, #tpu.memory_space<vmem>>, vector<4x512xf32>,
    return
  }
  func.func @transform_0(%arg0: i32) -> (i32, i32) {
    %c0_i32 = arith.constant 0 : i32
    %c0_i32_0 = arith.constant 0 : i32
    %c0_i32_1 = arith.constant 0 : i32
    return %c0_i32, %c0_i32_0 : i32, i32
  }
  func.func @transform_1(%arg0: i32) -> (i32, i32) {
    %c0_i32 = arith.constant 0 : i32
    %c0_i32_0 = arith.constant 0 : i32
    return %c0_i32, %arg0 : i32, i32
  }
  func.func @transform_2(%arg0: i32) -> (i32, i32) {
    %c0_i32 = arith.constant 0 : i32
    %c0_i32_0 = arith.constant 0 : i32
    %c0_i32_1 = arith.constant 0 : i32
    return %c0_i32, %c0_i32_0 : i32, i32
  }
  func.func @transform_3(%arg0: i32) -> (i32, i32) {
    %c0_i32 = arith.constant 0 : i32
    %c0_i32_0 = arith.constant 0 : i32
    %c0_i32_1 = arith.constant 0 : i32
    return %c0_i32, %c0_i32_0 : i32, i32
  }
  func.func @transform_4(%arg0: i32) -> (i32, i32) {
    %c0_i32 = arith.constant 0 : i32
    %c0_i32_0 = arith.constant 0 : i32
    return %c0_i32, %arg0 : i32, i32
  }
}

</mosaic_0001>

<llo_original>
// kernel: tpu_custom_call.1
$region0: #{tpu_custom_call.1}
  #allocation0 [shape = 'u32[]', space=smem, size = 0x4, offset = 0x4, fixed_abs, tag = 'smem constant byte address 0x4 - core index']
  #allocation1 [shape = 'u32[144,128]{1,0:T(1,128)}', space=vmem, size = 0x12000, scoped, tag = 'internal scratch']
  %s0 = inlined_call_operand.hbm [shape: f32[37,512], index: 0, kind: input, shape index: {}]
  %s1 = inlined_call_operand.hbm [shape: f32[4,512], index: 1, kind: input, shape index: {}]
  %s2 = inlined_call_operand.vmem [shape: bf16[4,37], index: 2, kind: input, shape index: {}]
  %s3 = inlined_call_operand.vmem [shape: bf16[4,37], index: 3, kind: input, shape index: {}]
  %s4 = inlined_call_operand.hbm [shape: f32[4,512], index: 4, kind: output, shape index: {}]
  %s5 = sld [smem:[#allocation0]]
  $region34: #{tpu_custom_call.1} parent=0
    _
  %s7 = ssub.s32 1, %s5
  %s8 = scalar_select 0, %s7, %s5
  $region1: #{tpu_custom_call.1} parent=0
    #allocation2 [shape = 'u8[81920]{0}', space=vmem, size = 0x14000, scoped, tag = 'input window, operand 0, single buffered']
    #allocation3 [shape = 's32[1]{0}', space=sflag, size = 0x4, scoped, tag = 'scoped memory for tpu_custom_call.1']
    #allocation4 [shape = 's32[1]{0}', space=sflag, size = 0x4, scoped, tag = 'scoped memory for tpu_custom_call.1']
    #allocation5 [shape = 'u8[8192]{0}', space=vmem, size = 0x2000, scoped, tag = 'input window, operand 1, single buffered']
    #allocation6 [shape = 's32[1]{0}', space=sflag, size = 0x4, scoped, tag = 'scoped memory for tpu_custom_call.1']
    #allocation7 [shape = 'u8[8192]{0}', space=vmem, size = 0x2000, scoped, tag = 'output window, operand 0, single buffered']
    %9 = vsyncpa [#allocation3], 0
    %10 = vsyncpa [#allocation6], 0
    %11 = vsyncpa [#allocation4], 0
    // Predicated region
    $region2: #{tpu_custom_call.1} parent=1 // pred_check
      _
    $region3: #{tpu_custom_call.1} parent=1 // pred_check_branch
      %13 = sbr.rel (0) target = $region5
    $region4: #{tpu_custom_call.1} parent=1 // pred_region
      %s15 = ssub.s32 2560, 2560
      %16 = vsyncadd [#allocation3], %s15
      %s17 = sshll.u32 [#allocation2], 4
      %s18 = int_to_ptr.vmem [resolvable:$true] %s17
      %23 = dma.hbm_to_vmem [thread:$0]  %s0, 2560, %s18, [#allocation3], 512, 512, 32
    $region5: #{tpu_custom_call.1} parent=1 // pred_fallthru
      _
    // Predicated region
    $region6: #{tpu_custom_call.1} parent=1 // pred_check
      _
    $region7: #{tpu_custom_call.1} parent=1 // pred_check_branch
      %25 = sbr.rel (0) target = $region9
    $region8: #{tpu_custom_call.1} parent=1 // pred_region
      %s27 = ssub.s32 256, 256
      %28 = vsyncadd [#allocation6], %s27
      %s30 = sshll.u32 [#allocation5], 4
      %s31 = int_to_ptr.vmem [resolvable:$true] %s30
      %33 = dma.hbm_to_vmem [thread:$0]  %s1, 256, %s31, [#allocation6]
    $region9: #{tpu_custom_call.1} parent=1 // pred_fallthru
      _
    // Predicated region
    $region10: #{tpu_custom_call.1} parent=1 // pred_check
      _
    $region11: #{tpu_custom_call.1} parent=1 // pred_check_branch
      %35 = sbr.rel (0) target = $region13
    $region12: #{tpu_custom_call.1} parent=1 // pred_region
      _
    $region13: #{tpu_custom_call.1} parent=1 // pred_fallthru
      _
    // Predicated region
    $region14: #{tpu_custom_call.1} parent=1 // pred_check
      _
    $region15: #{tpu_custom_call.1} parent=1 // pred_check_branch
      %37 = sbr.rel (0) target = $region17
    $region16: #{tpu_custom_call.1} parent=1 // pred_region
      _
    $region17: #{tpu_custom_call.1} parent=1 // pred_fallthru
      _
    // Predicated region
    $region18: #{tpu_custom_call.1} parent=1 // pred_check
      _
    $region19: #{tpu_custom_call.1} parent=1 // pred_check_branch
      %39 = sbr.rel (0) target = $region21
    $region20: #{tpu_custom_call.1} parent=1 // pred_region
      %40 = dma.done [#allocation3], 2560
    $region21: #{tpu_custom_call.1} parent=1 // pred_fallthru
      _
    // Predicated region
    $region22: #{tpu_custom_call.1} parent=1 // pred_check
      _
    $region23: #{tpu_custom_call.1} parent=1 // pred_check_branch
      %42 = sbr.rel (0) target = $region25
    $region24: #{tpu_custom_call.1} parent=1 // pred_region
      %43 = dma.done [#allocation6], 256
    $region25: #{tpu_custom_call.1} parent=1 // pred_fallthru
      _
    %v45 = vld [vmem:[#allocation5] sm:$0xff]
    %v46 = vld [vmem:[#allocation5 + $0x8] sm:$0xff]
    %v47 = vld [vmem:[#allocation2] sm:$0xff]
    %v48 = vld [vmem:[#allocation2 + $0x8] sm:$0xff]
    %v49 = vld [vmem:[#allocation2 + $0x10] sm:$0xff]
    %v50 = vld [vmem:[#allocation2 + $0x18] sm:$0xff]
    %v51 = vld [vmem:[#allocation2 + $0x20] sm:$0xff]
    %v52 = vld [vmem:[#allocation2 + $0x28] sm:$0xff]
    %v53 = vld [vmem:[#allocation2 + $0x30] sm:$0xff]
    %v54 = vld [vmem:[#allocation2 + $0x38] sm:$0xff]
    %v55 = vld [vmem:[#allocation2 + $0x40] sm:$0xff]
    %v56 = vld [vmem:[#allocation2 + $0x48] sm:$0xff]
    %v57 = vld [vmem:[#allocation2 + $0x50] sm:$0xff]
    %v58 = vld [vmem:[#allocation2 + $0x58] sm:$0xff]
    %v59 = vld [vmem:[#allocation2 + $0x60] sm:$0xff]
    %v60 = vld [vmem:[#allocation2 + $0x68] sm:$0xff]
    %v61 = vld [vmem:[#allocation2 + $0x70] sm:$0xff]
    %v62 = vld [vmem:[#allocation2 + $0x78] sm:$0xff]
    %v63 = vld [vmem:[#allocation2 + $0x80] sm:$0x1f]
    %v64 = vld [vmem:[#allocation2 + $0x88] sm:$0x1f]
    %v65 = vld [vmem:[#allocation2 + $0x90] sm:$0x1f]
    %v66 = vld [vmem:[#allocation2 + $0x98] sm:$0x1f]
    %v67 = vld [vmem:[%s2] sm:$0x3]
    %v70 = vcombine.high %v45, %v45
    %v71 = vcombine.high %v46, %v46
    %74 = vrot.lane.b32.xlu0 %v45, 17
    %v75 = vpop.permute.xlu0 %74
    %76 = vrot.lane.b32.xlu0 %v70, 17
    %v77 = vpop.permute.xlu0 %76
    %78 = vrot.lane.b32.xlu0 %v46, 17
    %v79 = vpop.permute.xlu0 %78
    %80 = vrot.lane.b32.xlu0 %v71, 17
    %v81 = vpop.permute.xlu0 %80
    %v82 = vlaneseq
    %v83 = vand.u32 %v82, 127
    %vm84 = vcmp.lt.s32.totalorder %v83, 17
    %v85 = vsel %vm84, %v79, %v81
    %v86 = vsel %vm84, %v77, %v79
    %v87 = vsel %vm84, %v75, %v77
    %v88 = vsel %vm84, %v81, %v75
    %89 = vrot.lane.b32.xlu0 %v45, 16
    %v90 = vpop.permute.xlu0 %89
    %91 = vrot.lane.b32.xlu0 %v70, 16
    %v92 = vpop.permute.xlu0 %91
    %93 = vrot.lane.b32.xlu0 %v46, 16
    %v94 = vpop.permute.xlu0 %93
    %95 = vrot.lane.b32.xlu0 %v71, 16
    %v96 = vpop.permute.xlu0 %95
    %vm97 = vcmp.lt.s32.totalorder %v83, 16
    %v98 = vsel %vm97, %v94, %v96
    %v99 = vsel %vm97, %v92, %v94
    %v100 = vsel %vm97, %v90, %v92
    %v101 = vsel %vm97, %v96, %v90
    %102 = vrot.lane.b32.xlu0 %v45, 15
    %v103 = vpop.permute.xlu0 %102
    %104 = vrot.lane.b32.xlu0 %v70, 15
    %v105 = vpop.permute.xlu0 %104
    %106 = vrot.lane.b32.xlu0 %v46, 15
    %v107 = vpop.permute.xlu0 %106
    %108 = vrot.lane.b32.xlu0 %v71, 15
    %v109 = vpop.permute.xlu0 %108
    %vm110 = vcmp.lt.s32.totalorder %v83, 15
    %v111 = vsel %vm110, %v107, %v109
    %v112 = vsel %vm110, %v105, %v107
    %v113 = vsel %vm110, %v103, %v105
    %v114 = vsel %vm110, %v109, %v103
    %115 = vrot.lane.b32.xlu0 %v45, 1
    %v116 = vpop.permute.xlu0 %115
    %117 = vrot.lane.b32.xlu0 %v70, 1
    %v118 = vpop.permute.xlu0 %117
    %119 = vrot.lane.b32.xlu0 %v46, 1
    %v120 = vpop.permute.xlu0 %119
    %121 = vrot.lane.b32.xlu0 %v71, 1
    %v122 = vpop.permute.xlu0 %121
    %vm123 = vcmp.lt.s32.totalorder %v83, 1
    %v124 = vsel %vm123, %v120, %v122
    %v125 = vsel %vm123, %v118, %v120
    %v126 = vsel %vm123, %v116, %v118
    %v127 = vsel %vm123, %v122, %v116
    %128 = vrot.lane.b32.xlu0 %v45, 127
    %v129 = vpop.permute.xlu0 %128
    %130 = vrot.lane.b32.xlu0 %v70, 127
    %v131 = vpop.permute.xlu0 %130
    %132 = vrot.lane.b32.xlu0 %v46, 127
    %v133 = vpop.permute.xlu0 %132
    %134 = vrot.lane.b32.xlu0 %v71, 127
    %v135 = vpop.permute.xlu0 %134
    %vm136 = vcmp.lt.s32.totalorder %v83, 127
    %v137 = vsel %vm136, %v133, %v135
    %v138 = vsel %vm136, %v131, %v133
    %v139 = vsel %vm136, %v129, %v131
    %v140 = vsel %vm136, %v135, %v129
    %141 = vrot.lane.b32.xlu0 %v45, 113
    %v142 = vpop.permute.xlu0 %141
    %143 = vrot.lane.b32.xlu0 %v70, 113
    %v144 = vpop.permute.xlu0 %143
    %145 = vrot.lane.b32.xlu0 %v46, 113
    %v146 = vpop.permute.xlu0 %145
    %147 = vrot.lane.b32.xlu0 %v71, 113
    %v148 = vpop.permute.xlu0 %147
    %vm149 = vcmp.lt.s32.totalorder %v83, 113
    %v150 = vsel %vm149, %v146, %v148
    %v151 = vsel %vm149, %v144, %v146
    %v152 = vsel %vm149, %v142, %v144
    %v153 = vsel %vm149, %v148, %v142
    %154 = vrot.lane.b32.xlu0 %v45, 112
    %v155 = vpop.permute.xlu0 %154
    %156 = vrot.lane.b32.xlu0 %v70, 112
    %v157 = vpop.permute.xlu0 %156
    %158 = vrot.lane.b32.xlu0 %v46, 112
    %v159 = vpop.permute.xlu0 %158
    %160 = vrot.lane.b32.xlu0 %v71, 112
    %v161 = vpop.permute.xlu0 %160
    %vm162 = vcmp.lt.s32.totalorder %v83, 112
    %v163 = vsel %vm162, %v159, %v161
    %v164 = vsel %vm162, %v157, %v159
    %v165 = vsel %vm162, %v155, %v157
    %v166 = vsel %vm162, %v161, %v155
    %167 = vrot.lane.b32.xlu0 %v45, 111
    %v168 = vpop.permute.xlu0 %167
    %169 = vrot.lane.b32.xlu0 %v70, 111
    %v170 = vpop.permute.xlu0 %169
    %171 = vrot.lane.b32.xlu0 %v46, 111
    %v172 = vpop.permute.xlu0 %171
    %173 = vrot.lane.b32.xlu0 %v71, 111
    %v174 = vpop.permute.xlu0 %173
    %vm175 = vcmp.lt.s32.totalorder %v83, 111
    %v176 = vsel %vm175, %v172, %v174
    %v177 = vsel %vm175, %v170, %v172
    %v178 = vsel %vm175, %v168, %v170
    %v179 = vsel %vm175, %v174, %v168
    %v184 = vrot.slane %v101, 4
    %v185 = vrot.slane %v100, 4
    %v186 = vrot.slane %v99, 4
    %v187 = vrot.slane %v98, 4
    %v196 = vrot.slane %v127, 4
    %v197 = vrot.slane %v126, 4
    %v198 = vrot.slane %v125, 4
    %v199 = vrot.slane %v124, 4
    %v208 = vrot.slane %v139, 4
    %v209 = vrot.slane %v138, 4
    %v210 = vrot.slane %v137, 4
    %v211 = vrot.slane %v140, 4
    %v220 = vrot.slane %v165, 4
    %v221 = vrot.slane %v164, 4
    %v222 = vrot.slane %v163, 4
    %v223 = vrot.slane %v166, 4
    %vm228 = vcmask 1043456
    %v229 = vsel %vm228, %v88, %v184
    %v230 = vsel %vm228, %v87, %v185
    %v231 = vsel %vm228, %v86, %v186
    %v232 = vsel %vm228, %v85, %v187
    %v233 = vsel %vm228, %v114, %v196
    %v234 = vsel %vm228, %v113, %v197
    %v235 = vsel %vm228, %v112, %v198
    %v236 = vsel %vm228, %v111, %v199
    %v237 = vsel %vm228, %v45, %v208
    %v238 = vsel %vm228, %v70, %v209
    %v239 = vsel %vm228, %v46, %v210
    %v240 = vsel %vm228, %v71, %v211
    %v241 = vsel %vm228, %v152, %v220
    %v242 = vsel %vm228, %v151, %v221
    %v243 = vsel %vm228, %v150, %v222
    %v244 = vsel %vm228, %v153, %v223
    %v245 = vsel %vm228, %v178, 1.0
    %v246 = vsel %vm228, %v177, 1.0
    %v247 = vsel %vm228, %v176, 1.0
    %v248 = vsel %vm228, %v179, 1.0
    %v249 = vmul.f32 %v229, %v47
    %v250 = vmul.f32 %v230, %v48
    %v251 = vmul.f32 %v231, %v49
    %v252 = vmul.f32 %v232, %v50
    %v253 = vmul.f32 %v233, %v51
    %v254 = vmul.f32 %v234, %v52
    %v255 = vmul.f32 %v235, %v53
    %v256 = vmul.f32 %v236, %v54
    %v257 = vmul.f32 %v237, %v55
    %v258 = vmul.f32 %v238, %v56
    %v259 = vmul.f32 %v239, %v57
    %v260 = vmul.f32 %v240, %v58
    %v261 = vmul.f32 %v241, %v59
    %v262 = vmul.f32 %v242, %v60
    %v263 = vmul.f32 %v243, %v61
    %v264 = vmul.f32 %v244, %v62
    %v265 = vmul.f32 %v245, %v63
    %v266 = vmul.f32 %v246, %v64
    %v267 = vmul.f32 %v247, %v65
    %v268 = vmul.f32 %v248, %v66
    %v269 = vpack.c.bf16 %v253, %v249
    %v270 = vpack.c.bf16 %v254, %v250
    %v271 = vpack.c.bf16 %v255, %v251
    %v272 = vpack.c.bf16 %v256, %v252
    %v273 = vpack.c.bf16 %v261, %v257
    %v274 = vpack.c.bf16 %v262, %v258
    %v275 = vpack.c.bf16 %v263, %v259
    %v276 = vpack.c.bf16 %v264, %v260
    %v277 = vpack.c.bf16 %v265, %v265
    %v278 = vpack.c.bf16 %v266, %v266
    %v279 = vpack.c.bf16 %v267, %v267
    %v280 = vpack.c.bf16 %v268, %v268
    %vm281 = vcmask 302080
    %v283 = vsel %vm281, %v67, 0
    %vm285 = vcmask 1041408
    %vm286 = vcmask 1042432
    %v287 = vsel %vm285, 4294967295, 65535
    %v288 = vsel %vm286, %v287, 0
    %v290 = vand.u32 %v277, %v288
    %v293 = vand.u32 %v278, %v288
    %v296 = vand.u32 %v279, %v288
    %v299 = vand.u32 %v280, %v288
    %301 = vmatprep.subr.bf16.mxu0 %v270
    %302 = vmatpush1.bf16.msra.mxu0 %v269
    %303 = vmatprep.subr.bf16.mxu0 %v274
    %304 = vmatpush1.bf16.msra.mxu0 %v273
    %305 = vmatprep.subr.bf16.mxu0 %v293
    %306 = vmatpush1.bf16.msra.mxu0 %v290
    %307 = vmatprep.subr.bf16.mxu0 0
    %308 = vmatpush1.bf16.msra.mxu0 0
    %309 = vmatprep.subr.bf16.mxu0 0
    %310 = vmatpush1.bf16.msra.mxu0 0
    %311 = vmatprep.subr.bf16.mxu0 0
    %312 = vmatpush1.bf16.msra.mxu0 0
    %313 = vmatprep.subr.bf16.mxu0 0
    %314 = vmatpush1.bf16.msra.mxu0 0
    %315 = vmatprep.subr.bf16.mxu0 0
    %316 = vmatpush1.bf16.msra.mxu0 0
    %317 = vmatprep.subr.bf16.mxu0 0
    %318 = vmatpush1.bf16.msra.mxu0 0
    %319 = vmatprep.subr.bf16.mxu0 0
    %320 = vmatpush1.bf16.msra.mxu0 0
    %321 = vmatprep.subr.bf16.mxu0 0
    %322 = vmatpush1.bf16.msra.mxu0 0
    %323 = vmatprep.subr.bf16.mxu0 0
    %324 = vmatpush1.bf16.msra.mxu0 0
    %325 = vmatprep.subr.bf16.mxu0 0
    %326 = vmatpush1.bf16.msra.mxu0 0
    %327 = vmatprep.subr.bf16.mxu0 0
    %328 = vmatpush1.bf16.msra.mxu0 0
    %329 = vmatprep.subr.bf16.mxu0 0
    %330 = vmatpush1.bf16.msra.mxu0 0
    %331 = vmatprep.subr.bf16.mxu0 0
    %332 = vmatpush1.bf16.msra.mxu0 0
    %333 = vmatprep.mubr.bf16.mxu0 0
    %334 = vmatmul.mubr.bf16.gmra.mrb[0].mxu0 %v283
    %v335 = vpop.f32.mrb[0].mxu0
    %v336 = vadd.f32 0.0, %v335
    %v337 = vpop.f32.mrb[0].mxu0
    %v338 = vadd.f32 0.0, %v337
    %v339 = vpop.f32.mrb[0].mxu0
    %v340 = vpop.f32.mrb[0].mxu0
    %341 = vdwg.mxu0
    %342 = vmatprep.subr.bf16.mxu0 %v272
    %343 = vmatpush1.bf16.msra.mxu0 %v271
    %344 = vmatprep.subr.bf16.mxu0 %v276
    %345 = vmatpush1.bf16.msra.mxu0 %v275
    %346 = vmatprep.subr.bf16.mxu0 %v299
    %347 = vmatpush1.bf16.msra.mxu0 %v296
    %348 = vmatprep.subr.bf16.mxu0 0
    %349 = vmatpush1.bf16.msra.mxu0 0
    %350 = vmatprep.subr.bf16.mxu0 0
    %351 = vmatpush1.bf16.msra.mxu0 0
    %352 = vmatprep.subr.bf16.mxu0 0
    %353 = vmatpush1.bf16.msra.mxu0 0
    %354 = vmatprep.subr.bf16.mxu0 0
    %355 = vmatpush1.bf16.msra.mxu0 0
    %356 = vmatprep.subr.bf16.mxu0 0
    %357 = vmatpush1.bf16.msra.mxu0 0
    %358 = vmatprep.subr.bf16.mxu0 0
    %359 = vmatpush1.bf16.msra.mxu0 0
    %360 = vmatprep.subr.bf16.mxu0 0
    %361 = vmatpush1.bf16.msra.mxu0 0
    %362 = vmatprep.subr.bf16.mxu0 0
    %363 = vmatpush1.bf16.msra.mxu0 0
    %364 = vmatprep.subr.bf16.mxu0 0
    %365 = vmatpush1.bf16.msra.mxu0 0
    %366 = vmatprep.subr.bf16.mxu0 0
    %367 = vmatpush1.bf16.msra.mxu0 0
    %368 = vmatprep.subr.bf16.mxu0 0
    %369 = vmatpush1.bf16.msra.mxu0 0
    %370 = vmatprep.subr.bf16.mxu0 0
    %371 = vmatpush1.bf16.msra.mxu0 0
    %372 = vmatprep.subr.bf16.mxu0 0
    %373 = vmatpush1.bf16.msra.mxu0 0
    %374 = vmatprep.mubr.bf16.mxu0 0
    %375 = vmatmul.mubr.bf16.gmra.mrb[0].mxu0 %v283
    %v376 = vpop.f32.mrb[0].mxu0
    %v377 = vadd.f32 0.0, %v376
    %v378 = vpop.f32.mrb[0].mxu0
    %v379 = vadd.f32 0.0, %v378
    %v380 = vpop.f32.mrb[0].mxu0
    %v381 = vpop.f32.mrb[0].mxu0
    %382 = vdwg.mxu0
    %vm383 = vcmp.gt.f32.partialorder %v336, 0.0
    %vm384 = vcmp.gt.f32.partialorder %v338, 0.0
    %vm385 = vcmp.gt.f32.partialorder %v377, 0.0
    %vm386 = vcmp.gt.f32.partialorder %v379, 0.0
    %v387 = vmul.f32 %v336, 0.2
    %v388 = vmul.f32 %v338, 0.2
    %v389 = vmul.f32 %v377, 0.2
    %v390 = vmul.f32 %v379, 0.2
    %v391 = vsel %vm383, %v336, %v387
    %v392 = vsel %vm384, %v338, %v388
    %v393 = vsel %vm385, %v377, %v389
    %v394 = vsel %vm386, %v379, %v390
    %v395 = vld [vmem:[%s3] sm:$0x3]
    %396 = vrot.lane.b32.xlu0 %v391, 17
    %v397 = vpop.permute.xlu0 %396
    %398 = vrot.lane.b32.xlu0 %v392, 17
    %v399 = vpop.permute.xlu0 %398
    %400 = vrot.lane.b32.xlu0 %v393, 17
    %v401 = vpop.permute.xlu0 %400
    %402 = vrot.lane.b32.xlu0 %v394, 17
    %v403 = vpop.permute.xlu0 %402
    %v404 = vsel %vm84, %v401, %v403
    %v405 = vsel %vm84, %v399, %v401
    %v406 = vsel %vm84, %v397, %v399
    %v407 = vsel %vm84, %v403, %v397
    %408 = vrot.lane.b32.xlu0 %v391, 16
    %v409 = vpop.permute.xlu0 %408
    %410 = vrot.lane.b32.xlu0 %v392, 16
    %v411 = vpop.permute.xlu0 %410
    %412 = vrot.lane.b32.xlu0 %v393, 16
    %v413 = vpop.permute.xlu0 %412
    %414 = vrot.lane.b32.xlu0 %v394, 16
    %v415 = vpop.permute.xlu0 %414
    %v416 = vsel %vm97, %v413, %v415
    %v417 = vsel %vm97, %v411, %v413
    %v418 = vsel %vm97, %v409, %v411
    %v419 = vsel %vm97, %v415, %v409
    %420 = vrot.lane.b32.xlu0 %v391, 15
    %v421 = vpop.permute.xlu0 %420
    %422 = vrot.lane.b32.xlu0 %v392, 15
    %v423 = vpop.permute.xlu0 %422
    %424 = vrot.lane.b32.xlu0 %v393, 15
    %v425 = vpop.permute.xlu0 %424
    %426 = vrot.lane.b32.xlu0 %v394, 15
    %v427 = vpop.permute.xlu0 %426
    %v428 = vsel %vm110, %v425, %v427
    %v429 = vsel %vm110, %v423, %v425
    %v430 = vsel %vm110, %v421, %v423
    %v431 = vsel %vm110, %v427, %v421
    %432 = vrot.lane.b32.xlu0 %v391, 1
    %v433 = vpop.permute.xlu0 %432
    %434 = vrot.lane.b32.xlu0 %v392, 1
    %v435 = vpop.permute.xlu0 %434
    %436 = vrot.lane.b32.xlu0 %v393, 1
    %v437 = vpop.permute.xlu0 %436
    %438 = vrot.lane.b32.xlu0 %v394, 1
    %v439 = vpop.permute.xlu0 %438
    %v440 = vsel %vm123, %v437, %v439
    %v441 = vsel %vm123, %v435, %v437
    %v442 = vsel %vm123, %v433, %v435
    %v443 = vsel %vm123, %v439, %v433
    %444 = vrot.lane.b32.xlu0 %v391, 127
    %v445 = vpop.permute.xlu0 %444
    %446 = vrot.lane.b32.xlu0 %v392, 127
    %v447 = vpop.permute.xlu0 %446
    %448 = vrot.lane.b32.xlu0 %v393, 127
    %v449 = vpop.permute.xlu0 %448
    %450 = vrot.lane.b32.xlu0 %v394, 127
    %v451 = vpop.permute.xlu0 %450
    %v452 = vsel %vm136, %v449, %v451
    %v453 = vsel %vm136, %v447, %v449
    %v454 = vsel %vm136, %v445, %v447
    %v455 = vsel %vm136, %v451, %v445
    %456 = vrot.lane.b32.xlu0 %v391, 113
    %v457 = vpop.permute.xlu0 %456
    %458 = vrot.lane.b32.xlu0 %v392, 113
    %v459 = vpop.permute.xlu0 %458
    %460 = vrot.lane.b32.xlu0 %v393, 113
    %v461 = vpop.permute.xlu0 %460
    %462 = vrot.lane.b32.xlu0 %v394, 113
    %v463 = vpop.permute.xlu0 %462
    %v464 = vsel %vm149, %v461, %v463
    %v465 = vsel %vm149, %v459, %v461
    %v466 = vsel %vm149, %v457, %v459
    %v467 = vsel %vm149, %v463, %v457
    %468 = vrot.lane.b32.xlu0 %v391, 112
    %v469 = vpop.permute.xlu0 %468
    %470 = vrot.lane.b32.xlu0 %v392, 112
    %v471 = vpop.permute.xlu0 %470
    %472 = vrot.lane.b32.xlu0 %v393, 112
    %v473 = vpop.permute.xlu0 %472
    %474 = vrot.lane.b32.xlu0 %v394, 112
    %v475 = vpop.permute.xlu0 %474
    %v476 = vsel %vm162, %v473, %v475
    %v477 = vsel %vm162, %v471, %v473
    %v478 = vsel %vm162, %v469, %v471
    %v479 = vsel %vm162, %v475, %v469
    %480 = vrot.lane.b32.xlu0 %v391, 111
    %v481 = vpop.permute.xlu0 %480
    %482 = vrot.lane.b32.xlu0 %v392, 111
    %v483 = vpop.permute.xlu0 %482
    %484 = vrot.lane.b32.xlu0 %v393, 111
    %v485 = vpop.permute.xlu0 %484
    %486 = vrot.lane.b32.xlu0 %v394, 111
    %v487 = vpop.permute.xlu0 %486
    %v488 = vsel %vm175, %v485, %v487
    %v489 = vsel %vm175, %v483, %v485
    %v490 = vsel %vm175, %v481, %v483
    %v491 = vsel %vm175, %v487, %v481
    %v496 = vrot.slane %v419, 4
    %v497 = vrot.slane %v418, 4
    %v498 = vrot.slane %v417, 4
    %v499 = vrot.slane %v416, 4
    %v508 = vrot.slane %v443, 4
    %v509 = vrot.slane %v442, 4
    %v510 = vrot.slane %v441, 4
    %v511 = vrot.slane %v440, 4
    %v520 = vrot.slane %v454, 4
    %v521 = vrot.slane %v453, 4
    %v522 = vrot.slane %v452, 4
    %v523 = vrot.slane %v455, 4
    %v532 = vrot.slane %v478, 4
    %v533 = vrot.slane %v477, 4
    %v534 = vrot.slane %v476, 4
    %v535 = vrot.slane %v479, 4
    %v540 = vsel %vm228, %v407, %v496
    %v541 = vsel %vm228, %v406, %v497
    %v542 = vsel %vm228, %v405, %v498
    %v543 = vsel %vm228, %v404, %v499
    %v544 = vsel %vm228, %v431, %v508
    %v545 = vsel %vm228, %v430, %v509
    %v546 = vsel %vm228, %v429, %v510
    %v547 = vsel %vm228, %v428, %v511
    %v548 = vsel %vm228, %v391, %v520
    %v549 = vsel %vm228, %v392, %v521
    %v550 = vsel %vm228, %v393, %v522
    %v551 = vsel %vm228, %v394, %v523
    %v552 = vsel %vm228, %v466, %v532
    %v553 = vsel %vm228, %v465, %v533
    %v554 = vsel %vm228, %v464, %v534
    %v555 = vsel %vm228, %v467, %v535
    %v556 = vsel %vm228, %v490, 1.0
    %v557 = vsel %vm228, %v489, 1.0
    %v558 = vsel %vm228, %v488, 1.0
    %v559 = vsel %vm228, %v491, 1.0
    %v560 = vmul.f32 %v540, %v47
    %v561 = vmul.f32 %v541, %v48
    %v562 = vmul.f32 %v542, %v49
    %v563 = vmul.f32 %v543, %v50
    %v564 = vmul.f32 %v544, %v51
    %v565 = vmul.f32 %v545, %v52
    %v566 = vmul.f32 %v546, %v53
    %v567 = vmul.f32 %v547, %v54
    %v568 = vmul.f32 %v548, %v55
    %v569 = vmul.f32 %v549, %v56
    %v570 = vmul.f32 %v550, %v57
    %v571 = vmul.f32 %v551, %v58
    %v572 = vmul.f32 %v552, %v59
    %v573 = vmul.f32 %v553, %v60
    %v574 = vmul.f32 %v554, %v61
    %v575 = vmul.f32 %v555, %v62
    %v576 = vmul.f32 %v556, %v63
    %v577 = vmul.f32 %v557, %v64
    %v578 = vmul.f32 %v558, %v65
    %v579 = vmul.f32 %v559, %v66
    %v580 = vpack.c.bf16 %v564, %v560
    %v581 = vpack.c.bf16 %v565, %v561
    %v582 = vpack.c.bf16 %v566, %v562
    %v583 = vpack.c.bf16 %v567, %v563
    %v584 = vpack.c.bf16 %v572, %v568
    %v585 = vpack.c.bf16 %v573, %v569
    %v586 = vpack.c.bf16 %v574, %v570
    %v587 = vpack.c.bf16 %v575, %v571
    %v588 = vpack.c.bf16 %v576, %v576
    %v589 = vpack.c.bf16 %v577, %v577
    %v590 = vpack.c.bf16 %v578, %v578
    %v591 = vpack.c.bf16 %v579, %v579
    %v593 = vsel %vm281, %v395, 0
    %v596 = vand.u32 %v588, %v288
    %v599 = vand.u32 %v589, %v288
    %v602 = vand.u32 %v590, %v288
    %v605 = vand.u32 %v591, %v288
    %607 = vmatprep.subr.bf16.mxu0 %v581
    %608 = vmatpush1.bf16.msra.mxu0 %v580
    %609 = vmatprep.subr.bf16.mxu0 %v585
    %610 = vmatpush1.bf16.msra.mxu0 %v584
    %611 = vmatprep.subr.bf16.mxu0 %v599
    %612 = vmatpush1.bf16.msra.mxu0 %v596
    %613 = vmatprep.subr.bf16.mxu0 0
    %614 = vmatpush1.bf16.msra.mxu0 0
    %615 = vmatprep.subr.bf16.mxu0 0
    %616 = vmatpush1.bf16.msra.mxu0 0
    %617 = vmatprep.subr.bf16.mxu0 0
    %618 = vmatpush1.bf16.msra.mxu0 0
    %619 = vmatprep.subr.bf16.mxu0 0
    %620 = vmatpush1.bf16.msra.mxu0 0
    %621 = vmatprep.subr.bf16.mxu0 0
    %622 = vmatpush1.bf16.msra.mxu0 0
    %623 = vmatprep.subr.bf16.mxu0 0
    %624 = vmatpush1.bf16.msra.mxu0 0
    %625 = vmatprep.subr.bf16.mxu0 0
    %626 = vmatpush1.bf16.msra.mxu0 0
    %627 = vmatprep.subr.bf16.mxu0 0
    %628 = vmatpush1.bf16.msra.mxu0 0
    %629 = vmatprep.subr.bf16.mxu0 0
    %630 = vmatpush1.bf16.msra.mxu0 0
    %631 = vmatprep.subr.bf16.mxu0 0
    %632 = vmatpush1.bf16.msra.mxu0 0
    %633 = vmatprep.subr.bf16.mxu0 0
    %634 = vmatpush1.bf16.msra.mxu0 0
    %635 = vmatprep.subr.bf16.mxu0 0
    %636 = vmatpush1.bf16.msra.mxu0 0
    %637 = vmatprep.subr.bf16.mxu0 0
    %638 = vmatpush1.bf16.msra.mxu0 0
    %639 = vmatprep.mubr.bf16.mxu0 0
    %640 = vmatmul.mubr.bf16.gmra.mrb[0].mxu0 %v593
    %v641 = vpop.f32.mrb[0].mxu0
    %v642 = vadd.f32 %v45, %v641
    %v643 = vpop.f32.mrb[0].mxu0
    %v644 = vadd.f32 %v70, %v643
    %v645 = vpop.f32.mrb[0].mxu0
    %v646 = vpop.f32.mrb[0].mxu0
    %647 = vdwg.mxu0
    %648 = vmatprep.subr.bf16.mxu0 %v583
    %649 = vmatpush1.bf16.msra.mxu0 %v582
    %650 = vmatprep.subr.bf16.mxu0 %v587
    %651 = vmatpush1.bf16.msra.mxu0 %v586
    %652 = vmatprep.subr.bf16.mxu0 %v605
    %653 = vmatpush1.bf16.msra.mxu0 %v602
    %654 = vmatprep.subr.bf16.mxu0 0
    %655 = vmatpush1.bf16.msra.mxu0 0
    %656 = vmatprep.subr.bf16.mxu0 0
    %657 = vmatpush1.bf16.msra.mxu0 0
    %658 = vmatprep.subr.bf16.mxu0 0
    %659 = vmatpush1.bf16.msra.mxu0 0
    %660 = vmatprep.subr.bf16.mxu0 0
    %661 = vmatpush1.bf16.msra.mxu0 0
    %662 = vmatprep.subr.bf16.mxu0 0
    %663 = vmatpush1.bf16.msra.mxu0 0
    %664 = vmatprep.subr.bf16.mxu0 0
    %665 = vmatpush1.bf16.msra.mxu0 0
    %666 = vmatprep.subr.bf16.mxu0 0
    %667 = vmatpush1.bf16.msra.mxu0 0
    %668 = vmatprep.subr.bf16.mxu0 0
    %669 = vmatpush1.bf16.msra.mxu0 0
    %670 = vmatprep.subr.bf16.mxu0 0
    %671 = vmatpush1.bf16.msra.mxu0 0
    %672 = vmatprep.subr.bf16.mxu0 0
    %673 = vmatpush1.bf16.msra.mxu0 0
    %674 = vmatprep.subr.bf16.mxu0 0
    %675 = vmatpush1.bf16.msra.mxu0 0
    %676 = vmatprep.subr.bf16.mxu0 0
    %677 = vmatpush1.bf16.msra.mxu0 0
    %678 = vmatprep.subr.bf16.mxu0 0
    %679 = vmatpush1.bf16.msra.mxu0 0
    %680 = vmatprep.mubr.bf16.mxu0 0
    %681 = vmatmul.mubr.bf16.gmra.mrb[0].mxu0 %v593
    %v682 = vpop.f32.mrb[0].mxu0
    %v683 = vadd.f32 %v46, %v682
    %v684 = vpop.f32.mrb[0].mxu0
    %v685 = vadd.f32 %v71, %v684
    %v686 = vpop.f32.mrb[0].mxu0
    %v687 = vpop.f32.mrb[0].mxu0
    %688 = vdwg.mxu0
    %vm689 = vcmp.gt.f32.partialorder %v642, 0.0
    %vm690 = vcmp.gt.f32.partialorder %v644, 0.0
    %vm691 = vcmp.gt.f32.partialorder %v683, 0.0
    %vm692 = vcmp.gt.f32.partialorder %v685, 0.0
    %v693 = vmul.f32 %v642, 0.2
    %v694 = vmul.f32 %v644, 0.2
    %v695 = vmul.f32 %v683, 0.2
    %v696 = vmul.f32 %v685, 0.2
    %v697 = vsel %vm689, %v642, %v693
    %v698 = vsel %vm690, %v644, %v694
    %v699 = vsel %vm691, %v683, %v695
    %v700 = vsel %vm692, %v685, %v696
    %v705 = vcombine.low %v697, %v698
    %v706 = vcombine.low %v699, %v700
    %709 = vst [vmem:[#allocation7] sm:$0xff] %v705
    %710 = vst [vmem:[#allocation7 + $0x8] sm:$0xff] %v706
    // Predicated region
    $region26: #{tpu_custom_call.1} parent=1 // pred_check
      _
    $region27: #{tpu_custom_call.1} parent=1 // pred_check_branch
      %712 = sbr.rel (0) target = $region29
    $region28: #{tpu_custom_call.1} parent=1 // pred_region
      %s714 = ssub.s32 256, 256
      %715 = vsyncadd [#allocation4], %s714
      %s717 = sshll.u32 [#allocation7], 4
      %s718 = int_to_ptr.vmem [resolvable:$true] %s717
      %720 = dma.vmem_to_hbm [thread:$0]  %s718, 256, %s4, [#allocation4]
    $region29: #{tpu_custom_call.1} parent=1 // pred_fallthru
      _
    // Predicated region
    $region30: #{tpu_custom_call.1} parent=1 // pred_check
      _
    $region31: #{tpu_custom_call.1} parent=1 // pred_check_branch
      %722 = sbr.rel (0) target = $region33
    $region32: #{tpu_custom_call.1} parent=1 // pred_region
      %723 = dma.done [#allocation4], 256
    $region33: #{tpu_custom_call.1} parent=1 // pred_fallthru
      _
    %724 = vsyncpa [#allocation3], 1
    %725 = vsyncpa [#allocation6], 1
    %726 = vsyncpa [#allocation4], 1

</llo_original>
